<compile_context>
chip_gen: v5e
topology: v5e:2x2
jax: 0.10.0
libtpu: 0.0.40
codegen_flags: <defaults>
</compile_context>

<pallas_src>
import jax
import jax.numpy as jnp
from jax.experimental import pallas as pl
from jax.experimental.pallas import tpu as pltpu

H1 = 128
H2 = 64


def _round_up(x, m):
    return ((x + m - 1) // m) * m


def dqn_kernel(x_ref, w1_ref, b1_ref, w2_ref, b2_ref, w3_ref, b3_ref, o_ref):
    # One batch tile per grid step; h1/h2 never touch HBM.
    # bf16 operands + f32 accumulation on the MXU; bias/ReLU on the VPU in f32.
    x = x_ref[...].astype(jnp.bfloat16)

    h1 = jnp.dot(x, w1_ref[...].astype(jnp.bfloat16),
                 preferred_element_type=jnp.float32)
    h1 = jnp.maximum(h1 + b1_ref[...], 0.0)

    h2 = jnp.dot(h1.astype(jnp.bfloat16), w2_ref[...].astype(jnp.bfloat16),
                 preferred_element_type=jnp.float32)
    h2 = jnp.maximum(h2 + b2_ref[...], 0.0)

    out = jnp.dot(h2.astype(jnp.bfloat16), w3_ref[...].astype(jnp.bfloat16),
                  preferred_element_type=jnp.float32)
    o_ref[...] = (out + b3_ref[...]).astype(o_ref.dtype)


def dqn_forward(x, params, *, tb=512):
    """x: [B, state_dim] float32; params: dict of w1,b1,w2,b2,w3,b3."""
    B, state_dim = x.shape
    action_dim = params["w3"].shape[1]

    # Batch tile: multiple of 8 (sublane); >=512 rows amortizes the ~0.35us
    # per-grid-step overhead for realistic replay-buffer batches, shrunk for
    # tiny demo batches.  At f32 a 512-row tile uses well under 1 MiB of VMEM,
    # so it is safe under the 16/32/32 MiB scoped defaults on v5e/v6e/v7x.
    TB = min(tb, _round_up(B, 8))
    padded_B = _round_up(B, TB)
    if padded_B != B:
        x = jnp.pad(x, ((0, padded_B - B), (0, 0)))

    grid = (padded_B // TB,)

    flops = 2 * padded_B * (state_dim * H1 + H1 * H2 + H2 * action_dim)
    bytes_accessed = 4 * (padded_B * (state_dim + action_dim)
                          + state_dim * H1 + H1
                          + H1 * H2 + H2
                          + H2 * action_dim + action_dim)

    out = pl.pallas_call(
        dqn_kernel,
        out_shape=jax.ShapeDtypeStruct((padded_B, action_dim), jnp.float32),
        grid_spec=pltpu.PrefetchScalarGridSpec(
            num_scalar_prefetch=0,
            grid=grid,
            in_specs=[
                # Activations: tiled over batch, pipelined.
                pl.BlockSpec((TB, state_dim), lambda i: (i, 0)),
                # Weights/biases: constant block index -> VMEM-resident.
                pl.BlockSpec((state_dim, H1), lambda i: (0, 0)),
                pl.BlockSpec((1, H1), lambda i: (0, 0)),
                pl.BlockSpec((H1, H2), lambda i: (0, 0)),
                pl.BlockSpec((1, H2), lambda i: (0, 0)),
                pl.BlockSpec((H2, action_dim), lambda i: (0, 0)),
                pl.BlockSpec((1, action_dim), lambda i: (0, 0)),
            ],
            out_specs=pl.BlockSpec((TB, action_dim), lambda i: (i, 0)),
        ),
        compiler_params=pltpu.CompilerParams(
            dimension_semantics=("parallel",),   # 2x on v7x megacore
        ),
        cost_estimate=pl.CostEstimate(
            flops=flops, transcendentals=0, bytes_accessed=bytes_accessed),
    )(x, params["w1"], params["b1"], params["w2"], params["b2"],
      params["w3"], params["b3"])

    return out[:B] if padded_B != B else out


def init_dqn_params(key, state_dim, action_dim):
    """Deterministic init mimicking nn.Linear's U(-1/sqrt(fan_in), 1/sqrt(fan_in))."""
    dims = [(state_dim, H1), (H1, H2), (H2, action_dim)]
    params = {}
    for i, (fan_in, fan_out) in enumerate(dims, start=1):
        key, kw, kb = jax.random.split(key, 3)
        bound = 1.0 / jnp.sqrt(jnp.float32(fan_in))
        params[f"w{i}"] = jax.random.uniform(
            kw, (fan_in, fan_out), jnp.float32, -bound, bound)
        params[f"b{i}"] = jax.random.uniform(
            kb, (1, fan_out), jnp.float32, -bound, bound)
    return params


def dqn_reference(x, params):
    h1 = jax.nn.relu(x @ params["w1"] + params["b1"])
    h2 = jax.nn.relu(h1 @ params["w2"] + params["b2"])
    return h2 @ params["w3"] + params["b3"]


if __name__ == "__main__":
    state_dim, action_dim, batch = 4, 2, 8

    key = jax.random.PRNGKey(0)
    key, kx = jax.random.split(key)
    x = jax.random.normal(kx, (batch, state_dim), jnp.float32)
    params = init_dqn_params(key, state_dim, action_dim)

    out = dqn_forward(x, params)
    jax.block_until_ready(out)
    ref = dqn_reference(x, params)
    assert out.shape == (batch, action_dim)
    # bf16 matmul operands (f32 accumulation) -> relaxed tolerance vs f32 ref.
    assert jnp.allclose(out, ref, atol=5e-2, rtol=5e-2), \
        f"max abs diff {jnp.max(jnp.abs(out - ref))}"

    # Exercise a multi-step grid + batch padding (B not a multiple of the tile).
    key, kx2 = jax.random.split(key)
    x2 = jax.random.normal(kx2, (20, state_dim), jnp.float32)
    out2 = dqn_forward(x2, params, tb=8)   # TB=8 -> padded to 24 rows, grid=(3,)
    jax.block_until_ready(out2)
    ref2 = dqn_reference(x2, params)
    assert out2.shape == (20, action_dim)
    assert jnp.allclose(out2, ref2, atol=5e-2, rtol=5e-2), \
        f"max abs diff {jnp.max(jnp.abs(out2 - ref2))}"

    print("KERNEL_OK")
</pallas_src>

<mosaic_0001>
module attributes {stable_mosaic.version = 11 : i64} {
  func.func @dqn_kernel(%arg0: i32, %arg1: memref<8x4xf32, #tpu.memory_space<vmem>>, %arg2: memref<4x128xf32, #tpu.memory_space<vmem>>, %arg3: memref<1x128xf32, #tpu.memory_space<vmem>>, %arg4: memref<128x64xf32, #tpu.memory_space<vmem>>, %arg5: memref<1x64xf32, #tpu.memory_space<vmem>>, %arg6: memref<64x2xf32, #tpu.memory_space<vmem>>, %arg7: memref<1x2xf32, #tpu.memory_space<vmem>>, %arg8: memref<8x2xf32, #tpu.memory_space<vmem>>) attributes {dimension_semantics = [#tpu.dimension_semantics<parallel>], iteration_bounds = array<i64: 1>, scalar_prefetch = 0 : i64, scratch_operands = 0 : i64, tpu.core_type = #tpu.core_type<tc>, window_params = [{transform_indices = @transform_0, window_bounds = array<i64: 8, 4>}, {pipeline_mode = #tpu.pipeline_mode<synchronous>, transform_indices = @transform_1, window_bounds = array<i64: 4, 128>}, {pipeline_mode = #tpu.pipeline_mode<synchronous>, transform_indices = @transform_2, window_bounds = array<i64: 1, 128>}, {pipeline_mode = #tpu.pipeline_mode<synchronous>, transform_indices = @transform_3, window_bounds = array<i64: 128, 64>}, {pipeline_mode = #tpu.pipeline_mode<synchronous>, transform_indices = @transform_4, window_bounds = array<i64: 1, 64>}, {pipeline_mode = #tpu.pipeline_mode<synchronous>, transform_indices = @transform_5, window_bounds = array<i64: 64, 2>}, {pipeline_mode = #tpu.pipeline_mode<synchronous>, transform_indices = @transform_6, window_bounds = array<i64: 1, 2>}, {transform_indices = @transform_7, window_bounds = array<i64: 8, 2>}]} {
    %c0 = arith.constant 0 : index
    %c0_0 = arith.constant 0 : index
    %0 = vector.load %arg1[%c0, %c0_0] : memref<8x4xf32, #tpu.memory_space<vmem>>, vector<8x4xf32>
    %1 = arith.truncf %0 : vector<8x4xf32> to vector<8x4xbf16>
    %c0_1 = arith.constant 0 : index
    %c0_2 = arith.constant 0 : index
    %2 = vector.load %arg2[%c0_1, %c0_2] : memref<4x128xf32, #tpu.memory_space<vmem>>, vector<4x128xf32>
    %3 = arith.truncf %2 : vector<4x128xf32> to vector<4x128xbf16>
    %cst = arith.constant dense<0.000000e+00> : vector<8x128xf32>
    %4 = tpu.matmul %1, %3, %cst {dimension_numbers = #tpu.dot_dimension_numbers<[1], [0], [0], [1], [0, 0, 1, 1], [], []>} : vector<8x4xbf16>, vector<4x128xbf16>, vector<8x128xf32> -> vector<8x128xf32>
    %c0_3 = arith.constant 0 : index
    %c0_4 = arith.constant 0 : index
    %5 = vector.load %arg3[%c0_3, %c0_4] : memref<1x128xf32, #tpu.memory_space<vmem>>, vector<1x128xf32>
    %6 = vector.broadcast %5 : vector<1x128xf32> to vector<8x128xf32>
    %7 = arith.addf %4, %6 : vector<8x128xf32>
    %cst_5 = arith.constant 0.000000e+00 : f32
    %8 = vector.broadcast %cst_5 : f32 to vector<8x128xf32>
    %9 = arith.maximumf %7, %8 : vector<8x128xf32>
    %10 = arith.truncf %9 : vector<8x128xf32> to vector<8x128xbf16>
    %c0_6 = arith.constant 0 : index
    %c0_7 = arith.constant 0 : index
    %11 = vector.load %arg4[%c0_6, %c0_7] : memref<128x64xf32, #tpu.memory_space<vmem>>, vector<128x64xf32>
    %12 = arith.truncf %11 : vector<128x64xf32> to vector<128x64xbf16>
    %cst_8 = arith.constant dense<0.000000e+00> : vector<8x64xf32>
    %13 = tpu.matmul %10, %12, %cst_8 {dimension_numbers = #tpu.dot_dimension_numbers<[1], [0], [0], [1], [0, 0, 1, 1], [], []>} : vector<8x128xbf16>, vector<128x64xbf16>, vector<8x64xf32> -> vector<8x64xf32>
    %c0_9 = arith.constant 0 : index
    %c0_10 = arith.constant 0 : index
    %14 = vector.load %arg5[%c0_9, %c0_10] : memref<1x64xf32, #tpu.memory_space<vmem>>, vector<1x64xf32>
    %15 = vector.broadcast %14 : vector<1x64xf32> to vector<8x64xf32>
    %16 = arith.addf %13, %15 : vector<8x64xf32>
    %cst_11 = arith.constant 0.000000e+00 : f32
    %17 = vector.broadcast %cst_11 : f32 to vector<8x64xf32>
    %18 = arith.maximumf %16, %17 : vector<8x64xf32>
    %19 = arith.truncf %18 : vector<8x64xf32> to vector<8x64xbf16>
    %c0_12 = arith.constant 0 : index
    %c0_13 = arith.constant 0 : index
    %20 = vector.load %arg6[%c0_12, %c0_13] : memref<64x2xf32, #tpu.memory_space<vmem>>, vector<64x2xf32>
    %21 = arith.truncf %20 : vector<64x2xf32> to vector<64x2xbf16>
    %cst_14 = arith.constant dense<0.000000e+00> : vector<8x2xf32>
    %22 = tpu.matmul %19, %21, %cst_14 {dimension_numbers = #tpu.dot_dimension_numbers<[1], [0], [0], [1], [0, 0, 1, 1], [], []>} : vector<8x64xbf16>, vector<64x2xbf16>, vector<8x2xf32> -> vector<8x2xf32>
    %c0_15 = arith.constant 0 : index
    %c0_16 = arith.constant 0 : index
    %23 = vector.load %arg7[%c0_15, %c0_16] : memref<1x2xf32, #tpu.memory_space<vmem>>, vector<1x2xf32>
    %24 = vector.broadcast %23 : vector<1x2xf32> to vector<8x2xf32>
    %25 = arith.addf %22, %24 : vector<8x2xf32>
    %c0_17 = arith.constant 0 : index
    %c0_18 = arith.constant 0 : index
    %26 = vector.load %arg8[%c0_17, %c0_18] : memref<8x2xf32, #tpu.memory_space<vmem>>, vector<8x2xf32>
    tpu.vector_store %arg8[%c0_17, %c0_18], %25 {strides = array<i32>} : memref<8x2xf32, #tpu.memory_space<vmem>>, vector<8x2xf32>,
    return
  }
  func.func @transform_0(%arg0: i32) -> (i32, i32) {
    %c0_i32 = arith.constant 0 : i32
    %c0_i32_0 = arith.constant 0 : i32
    return %arg0, %c0_i32 : i32, i32
  }
  func.func @transform_1(%arg0: i32) -> (i32, i32) {
    %c0_i32 = arith.constant 0 : i32
    %c0_i32_0 = arith.constant 0 : i32
    %c0_i32_1 = arith.constant 0 : i32
    return %c0_i32, %c0_i32_0 : i32, i32
  }
  func.func @transform_2(%arg0: i32) -> (i32, i32) {
    %c0_i32 = arith.constant 0 : i32
    %c0_i32_0 = arith.constant 0 : i32
    %c0_i32_1 = arith.constant 0 : i32
    return %c0_i32, %c0_i32_0 : i32, i32
  }
  func.func @transform_3(%arg0: i32) -> (i32, i32) {
    %c0_i32 = arith.constant 0 : i32
    %c0_i32_0 = arith.constant 0 : i32
    %c0_i32_1 = arith.constant 0 : i32
    return %c0_i32, %c0_i32_0 : i32, i32
  }
  func.func @transform_4(%arg0: i32) -> (i32, i32) {
    %c0_i32 = arith.constant 0 : i32
    %c0_i32_0 = arith.constant 0 : i32
    %c0_i32_1 = arith.constant 0 : i32
    return %c0_i32, %c0_i32_0 : i32, i32
  }
  func.func @transform_5(%arg0: i32) -> (i32, i32) {
    %c0_i32 = arith.constant 0 : i32
    %c0_i32_0 = arith.constant 0 : i32
    %c0_i32_1 = arith.constant 0 : i32
    return %c0_i32, %c0_i32_0 : i32, i32
  }
  func.func @transform_6(%arg0: i32) -> (i32, i32) {
    %c0_i32 = arith.constant 0 : i32
    %c0_i32_0 = arith.constant 0 : i32
    %c0_i32_1 = arith.constant 0 : i32
    return %c0_i32, %c0_i32_0 : i32, i32
  }
  func.func @transform_7(%arg0: i32) -> (i32, i32) {
    %c0_i32 = arith.constant 0 : i32
    %c0_i32_0 = arith.constant 0 : i32
    return %arg0, %c0_i32 : i32, i32
  }
}

</mosaic_0001>

<llo_original>
// kernel: tpu_custom_call.1
$region0: #{tpu_custom_call.1}
  #allocation0 [shape = 'u32[]', space=smem, size = 0x4, offset = 0x4, fixed_abs, tag = 'smem constant byte address 0x4 - core index']
  #allocation1 [shape = 'u32[72,128]{1,0:T(1,128)}', space=vmem, size = 0x9000, scoped, tag = 'internal scratch']
  %s0 = inlined_call_operand.vmem [shape: f32[8,4], index: 0, kind: input, shape index: {}]
  %s1 = inlined_call_operand.vmem [shape: f32[4,128], index: 1, kind: input, shape index: {}]
  %s2 = inlined_call_operand.vmem [shape: f32[1,128], index: 2, kind: input, shape index: {}]
  %s3 = inlined_call_operand.vmem [shape: f32[128,64], index: 3, kind: input, shape index: {}]
  %s4 = inlined_call_operand.vmem [shape: f32[1,64], index: 4, kind: input, shape index: {}]
  %s5 = inlined_call_operand.vmem [shape: f32[64,2], index: 5, kind: input, shape index: {}]
  %s6 = inlined_call_operand.vmem [shape: f32[1,2], index: 6, kind: input, shape index: {}]
  %s7 = inlined_call_operand.vmem [shape: f32[8,2], index: 7, kind: output, shape index: {}]
  %s8 = sld [smem:[#allocation0]]
  $region38: #{tpu_custom_call.1} parent=0
    _
  %s10 = ssub.s32 1, %s8
  %s11 = scalar_select 0, %s10, %s8
  // Predicated region
  $region2: #{tpu_custom_call.1} parent=0 // pred_check
    _
  $region3: #{tpu_custom_call.1} parent=0 // pred_check_branch
    %13 = sbr.rel (0) target = $region5
  $region4: #{tpu_custom_call.1} parent=0 // pred_region
    _
  $region5: #{tpu_custom_call.1} parent=0 // pred_fallthru
    _
  // Predicated region
  $region6: #{tpu_custom_call.1} parent=0 // pred_check
    _
  $region7: #{tpu_custom_call.1} parent=0 // pred_check_branch
    %15 = sbr.rel (0) target = $region9
  $region8: #{tpu_custom_call.1} parent=0 // pred_region
    _
  $region9: #{tpu_custom_call.1} parent=0 // pred_fallthru
    _
  // Predicated region
  $region10: #{tpu_custom_call.1} parent=0 // pred_check
    _
  $region11: #{tpu_custom_call.1} parent=0 // pred_check_branch
    %17 = sbr.rel (0) target = $region13
  $region12: #{tpu_custom_call.1} parent=0 // pred_region
    _
  $region13: #{tpu_custom_call.1} parent=0 // pred_fallthru
    _
  // Predicated region
  $region14: #{tpu_custom_call.1} parent=0 // pred_check
    _
  $region15: #{tpu_custom_call.1} parent=0 // pred_check_branch
    %19 = sbr.rel (0) target = $region17
  $region16: #{tpu_custom_call.1} parent=0 // pred_region
    _
  $region17: #{tpu_custom_call.1} parent=0 // pred_fallthru
    _
  // Predicated region
  $region18: #{tpu_custom_call.1} parent=0 // pred_check
    _
  $region19: #{tpu_custom_call.1} parent=0 // pred_check_branch
    %21 = sbr.rel (0) target = $region21
  $region20: #{tpu_custom_call.1} parent=0 // pred_region
    _
  $region21: #{tpu_custom_call.1} parent=0 // pred_fallthru
    _
  // Predicated region
  $region22: #{tpu_custom_call.1} parent=0 // pred_check
    _
  $region23: #{tpu_custom_call.1} parent=0 // pred_check_branch
    %23 = sbr.rel (0) target = $region25
  $region24: #{tpu_custom_call.1} parent=0 // pred_region
    _
  $region25: #{tpu_custom_call.1} parent=0 // pred_fallthru
    _
  // Predicated region
  $region26: #{tpu_custom_call.1} parent=0 // pred_check
    _
  $region27: #{tpu_custom_call.1} parent=0 // pred_check_branch
    %25 = sbr.rel (0) target = $region29
  $region28: #{tpu_custom_call.1} parent=0 // pred_region
    _
  $region29: #{tpu_custom_call.1} parent=0 // pred_fallthru
    _
  %v27 = vld [vmem:[%s0] sm:$0xff]
  %v28 = vpack.c.bf16 %v27, %v27
  %v29 = vld [vmem:[%s1] sm:$0xf]
  %v30 = vpack.c.bf16 %v29, %v29
  %v31 = vld [vmem:[%s2] sm:$0x1]
  %v33 = vperm.slane %v31, 0
  %vm35 = vcmask 31744
  %v37 = vsel %vm35, %v28, 0
  %vm39 = vcmask 1041408
  %v41 = vsel %vm39, %v30, 0
  %43 = vmatpush.bf16.msra.mxu0 0
  %44 = vmatpush.bf16.msra.mxu0 0
  %45 = vmatpush.bf16.msra.mxu0 0
  %46 = vmatpush.bf16.msra.mxu0 0
  %47 = vmatpush.bf16.msra.mxu0 0
  %48 = vmatpush.bf16.msra.mxu0 0
  %49 = vmatpush.bf16.msra.mxu0 0
  %50 = vmatpush.bf16.msra.mxu0 %v41
  %51 = vmatmul.bf16.gmra.mxu0 %v37
  %v52 = vpop.f32.mrf.mxu0
  %v53 = vadd.f32 %v33, %v52
  %v54 = vpop.f32.mrf.mxu0
  %55 = vdwg.mxu0
  %v56 = vmax.f32 %v53, 0.0
  %v57 = vpack.c.bf16 %v56, %v56
  %v58 = vld [vmem:[%s3] sm:$0xff]
  %v59 = vld [vmem:[%s3 + $0x8] sm:$0xff]
  %v60 = vld [vmem:[%s3 + $0x10] sm:$0xff]
  %v61 = vld [vmem:[%s3 + $0x18] sm:$0xff]
  %v62 = vld [vmem:[%s3 + $0x20] sm:$0xff]
  %v63 = vld [vmem:[%s3 + $0x28] sm:$0xff]
  %v64 = vld [vmem:[%s3 + $0x30] sm:$0xff]
  %v65 = vld [vmem:[%s3 + $0x38] sm:$0xff]
  %v66 = vld [vmem:[%s3 + $0x40] sm:$0xff]
  %v67 = vld [vmem:[%s3 + $0x48] sm:$0xff]
  %v68 = vld [vmem:[%s3 + $0x50] sm:$0xff]
  %v69 = vld [vmem:[%s3 + $0x58] sm:$0xff]
  %v70 = vld [vmem:[%s3 + $0x60] sm:$0xff]
  %v71 = vld [vmem:[%s3 + $0x68] sm:$0xff]
  %v72 = vld [vmem:[%s3 + $0x70] sm:$0xff]
  %v73 = vld [vmem:[%s3 + $0x78] sm:$0xff]
  %v74 = vpack.c.bf16 %v59, %v58
  %v75 = vpack.c.bf16 %v61, %v60
  %v76 = vpack.c.bf16 %v63, %v62
  %v77 = vpack.c.bf16 %v65, %v64
  %v78 = vpack.c.bf16 %v67, %v66
  %v79 = vpack.c.bf16 %v69, %v68
  %v80 = vpack.c.bf16 %v71, %v70
  %v81 = vpack.c.bf16 %v73, %v72
  %v82 = vld [vmem:[%s4] sm:$0x1]
  %v84 = vperm.slane %v82, 0
  %86 = vmatpush.bf16.msra.mxu0 %v81
  %87 = vmatpush.bf16.msra.mxu0 %v80
  %88 = vmatpush.bf16.msra.mxu0 %v79
  %89 = vmatpush.bf16.msra.mxu0 %v78
  %90 = vmatpush.bf16.msra.mxu0 %v77
  %91 = vmatpush.bf16.msra.mxu0 %v76
  %92 = vmatpush.bf16.msra.mxu0 %v75
  %93 = vmatpush.bf16.msra.mxu0 %v74
  %94 = vmatmul.bf16.gmra.mxu0 %v57
  %v95 = vpop.f32.mrf.mxu0
  %v96 = vadd.f32 %v84, %v95
  %v97 = vpop.f32.mrf.mxu0
  %98 = vdwg.mxu0
  %v99 = vmax.f32 %v96, 0.0
  %v100 = vpack.c.bf16 %v99, %v99
  %v101 = vld [vmem:[%s5] sm:$0xff]
  %v102 = vld [vmem:[%s5 + $0x8] sm:$0xff]
  %v103 = vld [vmem:[%s5 + $0x10] sm:$0xff]
  %v104 = vld [vmem:[%s5 + $0x18] sm:$0xff]
  %v105 = vld [vmem:[%s5 + $0x20] sm:$0xff]
  %v106 = vld [vmem:[%s5 + $0x28] sm:$0xff]
  %v107 = vld [vmem:[%s5 + $0x30] sm:$0xff]
  %v108 = vld [vmem:[%s5 + $0x38] sm:$0xff]
  %v109 = vpack.c.bf16 %v102, %v101
  %v110 = vpack.c.bf16 %v104, %v103
  %v111 = vpack.c.bf16 %v106, %v105
  %v112 = vpack.c.bf16 %v108, %v107
  %v113 = vld [vmem:[%s6] sm:$0x1]
  %v115 = vperm.slane %v113, 0
  %vm117 = vcmask 523264
  %v119 = vsel %vm117, %v100, 0
  %121 = vmatpush.bf16.msra.mxu0 0
  %122 = vmatpush.bf16.msra.mxu0 0
  %123 = vmatpush.bf16.msra.mxu0 0
  %124 = vmatpush.bf16.msra.mxu0 0
  %125 = vmatpush.bf16.msra.mxu0 %v112
  %126 = vmatpush.bf16.msra.mxu0 %v111
  %127 = vmatpush.bf16.msra.mxu0 %v110
  %128 = vmatpush.bf16.msra.mxu0 %v109
  %129 = vmatmul.bf16.gmra.mxu0 %v119
  %v130 = vpop.f32.mrf.mxu0
  %v131 = vadd.f32 %v115, %v130
  %v132 = vpop.f32.mrf.mxu0
  %133 = vdwg.mxu0
  %vm134 = vcmask 15360
  %135 = vst.msk [vmem:[%s7] sm:$0xff] %vm134, %v131
  // Predicated region
  $region30: #{tpu_custom_call.1} parent=0 // pred_check
    _
  $region31: #{tpu_custom_call.1} parent=0 // pred_check_branch
    %137 = sbr.rel (0) target = $region33
  $region32: #{tpu_custom_call.1} parent=0 // pred_region
    _
  $region33: #{tpu_custom_call.1} parent=0 // pred_fallthru
    _
  // Predicated region
  $region34: #{tpu_custom_call.1} parent=0 // pred_check
    _
  $region35: #{tpu_custom_call.1} parent=0 // pred_check_branch
    %139 = sbr.rel (0) target = $region37
  $region36: #{tpu_custom_call.1} parent=0 // pred_region
    _
  $region37: #{tpu_custom_call.1} parent=0 // pred_fallthru
    _

</llo_original>
